<compile_context>
chip_gen: v7x
topology: tpu7x:2x2x1
jax: 0.10.0
libtpu: 0.0.40
codegen_flags: <defaults>
</compile_context>

<pallas_src>
import math
import functools

import jax
import jax.numpy as jnp
from jax.experimental import pallas as pl
from jax.experimental.pallas import tpu as pltpu


# ----------------------------------------------------------------------------
# Fast path: embedding table + positional encoding resident in VMEM.
# ----------------------------------------------------------------------------
def _embed_vmem_kernel(ids_ref, emb_ref, pe_ref, o_ref, row_buf, *, tm, spb, scale):
    blk = pl.program_id(0)
    base = blk * tm

    # Row gather from the VMEM-resident table: scalar id from SMEM, dynamic
    # (1, D) load from VMEM -- no DMA descriptors, no semaphores.
    for j in range(tm):
        tok = ids_ref[base + j]
        row_buf[pl.ds(j, 1), :] = emb_ref[pl.ds(tok, 1), :]

    # Positional-encoding block for these tm tokens (PE is fully resident).
    if spb == 1:
        pe_blk = pe_ref[...]
    else:
        pe_off = pl.multiple_of((blk % spb) * tm, tm)
        pe_blk = pe_ref[pl.ds(pe_off, tm), :]

    # Fused scale + PE add; single dense lane-aligned (tm, D) store.
    o_ref[...] = (row_buf[...].astype(jnp.float32) * scale + pe_blk).astype(o_ref.dtype)
    # TODO(synk): nn.Dropout(p=0.1) applies only in training mode; eval-mode
    # identity is implemented here (could use pltpu.prng_seed/prng_random_bits).


# ----------------------------------------------------------------------------
# Large-vocab path: table stays in HBM, double-buffered row-gather DMAs.
# ----------------------------------------------------------------------------
def _embed_hbm_kernel(ids_ref, emb_hbm, pe_ref, o_ref, row_buf, sems, *, tm, spb, scale):
    blk = pl.program_id(0)
    slot = blk % 2

    def issue_gather(block_idx, dst_slot):
        base = block_idx * tm
        for j in range(tm):
            tok = ids_ref[base + j]                     # scalar read from SMEM
            pltpu.make_async_copy(
                emb_hbm.at[tok], row_buf.at[dst_slot, j], sems.at[dst_slot]
            ).start()

    # Prime the pipeline on the very first grid step.
    @pl.when(blk == 0)
    def _():
        issue_gather(blk, slot)

    # Prefetch the next block's rows before waiting on the current slot, so the
    # HBM gather latency overlaps this step's compute + writeback.  (The next
    # block's ids are read from SMEM before any .wait().)
    @pl.when(blk + 1 < pl.num_programs(0))
    def _():
        issue_gather(blk + 1, 1 - slot)

    # One aggregated wait for all tm row DMAs of the current slot: the wait
    # descriptor's byte count (tm * D * itemsize) equals the sum of the row
    # copies that signalled this semaphore.
    pltpu.make_async_copy(row_buf.at[slot], row_buf.at[slot], sems.at[slot]).wait()

    if spb == 1:
        pe_blk = pe_ref[...]
    else:
        pe_off = pl.multiple_of((blk % spb) * tm, tm)
        pe_blk = pe_ref[pl.ds(pe_off, tm), :]

    o_ref[...] = (row_buf[slot].astype(jnp.float32) * scale + pe_blk).astype(o_ref.dtype)


# ----------------------------------------------------------------------------
# Wrapper
# ----------------------------------------------------------------------------
def _pick_tile(seq_len, cap):
    """Largest multiple of 8 that divides seq_len and is <= cap."""
    tile = 8
    for cand in range(8, min(seq_len, cap) + 1, 8):
        if seq_len % cand == 0:
            tile = cand
    return tile


def embeddings_forward(token_ids, emb_table, pos_encoding, *,
                       max_tm=256, hbm_max_tm=64,
                       vmem_table_budget=8 * 1024 * 1024):
    """token_ids: (B, S) int; emb_table: (V, D); pos_encoding: (>=S, D)."""
    B, S = token_ids.shape
    V, D = emb_table.shape
    assert D % 128 == 0, "d_model must be a multiple of 128 (lane-dense tiles)"
    assert S % 8 == 0, "sequence length must be a multiple of 8 (sublane-dense tiles)"
    assert pos_encoding.shape[0] >= S and pos_encoding.shape[-1] == D

    N = B * S
    ids_flat = token_ids.reshape(N).astype(jnp.int32)
    pe = pos_encoding[:S].astype(jnp.float32)
    scale = float(math.sqrt(D))

    itemsize = jnp.dtype(emb_table.dtype).itemsize
    table_bytes = V * D * itemsize
    pe_bytes = S * D * 4
    use_vmem_table = table_bytes <= vmem_table_budget

    tm = _pick_tile(S, max_tm if use_vmem_table else hbm_max_tm)
    spb = S // tm                       # positional-encoding blocks per sequence
    num_blocks = N // tm
    out_blk_bytes = tm * D * 4

    if use_vmem_table:
        kernel = functools.partial(_embed_vmem_kernel, tm=tm, spb=spb, scale=scale)
        in_specs = [
            pl.BlockSpec((V, D), lambda i, ids: (0, 0)),   # table resident in VMEM
            pl.BlockSpec((S, D), lambda i, ids: (0, 0)),   # PE resident in VMEM
        ]
        scratch_shapes = [pltpu.VMEM((tm, D), emb_table.dtype)]
        dim_sem = ("parallel",)         # independent blocks -> shard across v7x TCs
        vmem_need = 2 * table_bytes + 2 * pe_bytes + 2 * out_blk_bytes + tm * D * itemsize
    else:
        kernel = functools.partial(_embed_hbm_kernel, tm=tm, spb=spb, scale=scale)
        in_specs = [
            pl.BlockSpec(memory_space=pl.ANY),             # table stays in HBM
            pl.BlockSpec((S, D), lambda i, ids: (0, 0)),   # PE resident in VMEM
        ]
        scratch_shapes = [
            pltpu.VMEM((2, tm, D), emb_table.dtype),       # double-buffered gather rows
            pltpu.SemaphoreType.DMA((2,)),                 # one aggregated sem per slot
        ]
        # Cross-grid-step double buffering relies on sequential iteration order.
        dim_sem = ("arbitrary",)
        vmem_need = 2 * pe_bytes + 2 * out_blk_bytes + 2 * tm * D * itemsize

    cp_kwargs = dict(dimension_semantics=dim_sem)
    if vmem_need > 28 * 1024 * 1024:    # only raise the scoped VMEM limit if needed
        cp_kwargs["vmem_limit_bytes"] = min(int(vmem_need * 5 // 4), 100 * 1024 * 1024)

    out = pl.pallas_call(
        kernel,
        out_shape=jax.ShapeDtypeStruct((N, D), jnp.float32),
        grid_spec=pltpu.PrefetchScalarGridSpec(
            num_scalar_prefetch=1,                          # token ids -> SMEM
            grid=(num_blocks,),
            in_specs=in_specs,
            out_specs=pl.BlockSpec((tm, D), lambda i, ids: (i, 0)),
            scratch_shapes=scratch_shapes,
        ),
        compiler_params=pltpu.CompilerParams(**cp_kwargs),
    )(ids_flat, emb_table, pe)

    return out.reshape(B, S, D)


# ----------------------------------------------------------------------------
if __name__ == "__main__":
    B, S = 2, 8
    D_MODEL, VOCAB, MAX_LEN = 128, 1000, 16

    key = jax.random.PRNGKey(0)
    k_ids, k_emb = jax.random.split(key)

    token_ids = jax.random.randint(k_ids, (B, S), 0, VOCAB, dtype=jnp.int32)
    emb_table = 0.02 * jax.random.normal(k_emb, (VOCAB, D_MODEL), jnp.float32)

    # Standard sinusoidal positional encoding (MAX_LEN, D_MODEL).
    pos = jnp.arange(MAX_LEN, dtype=jnp.float32)[:, None]
    div = jnp.exp(
        jnp.arange(0, D_MODEL, 2, dtype=jnp.float32) * (-math.log(10000.0) / D_MODEL)
    )
    pe = jnp.zeros((MAX_LEN, D_MODEL), jnp.float32)
    pe = pe.at[:, 0::2].set(jnp.sin(pos * div))
    pe = pe.at[:, 1::2].set(jnp.cos(pos * div))

    # Pure-JAX reference (eval-mode semantics).
    ref = emb_table[token_ids] * math.sqrt(D_MODEL) + pe[:S][None, :, :]

    # 1) VMEM fast path (small table -> resident in VMEM).
    fwd_fast = jax.jit(embeddings_forward)
    out_fast = fwd_fast(token_ids, emb_table, pe)
    jax.block_until_ready(out_fast)
    assert out_fast.shape == (B, S, D_MODEL)
    assert jnp.all(jnp.isfinite(out_fast))
    assert jnp.allclose(out_fast, ref, atol=1e-5, rtol=1e-5), \
        float(jnp.max(jnp.abs(out_fast - ref)))

    # 2) Large-vocab path (table kept in HBM, double-buffered row-gather DMAs),
    #    forced here by setting the VMEM-table budget to zero.
    fwd_hbm = jax.jit(functools.partial(embeddings_forward, vmem_table_budget=0))
    out_hbm = fwd_hbm(token_ids, emb_table, pe)
    jax.block_until_ready(out_hbm)
    assert jnp.allclose(out_hbm, ref, atol=1e-5, rtol=1e-5), \
        float(jnp.max(jnp.abs(out_hbm - ref)))

    print("KERNEL_OK")
</pallas_src>

<mosaic_0001>
module attributes {stable_mosaic.version = 11 : i64} {
  func.func @_embed_vmem_kernel(%arg0: i32, %arg1: memref<16xi32, #tpu.memory_space<smem>>, %arg2: memref<1000x128xf32, #tpu.memory_space<vmem>>, %arg3: memref<8x128xf32, #tpu.memory_space<vmem>>, %arg4: memref<8x128xf32, #tpu.memory_space<vmem>>, %arg5: memref<8x128xf32, #tpu.memory_space<vmem>>) attributes {dimension_semantics = [#tpu.dimension_semantics<parallel>], iteration_bounds = array<i64: 2>, scalar_prefetch = 1 : i64, scratch_operands = 1 : i64, tpu.core_type = #tpu.core_type<tc>, window_params = [{pipeline_mode = #tpu.pipeline_mode<synchronous>, transform_indices = @transform_0, window_bounds = array<i64: 1000, 128>}, {pipeline_mode = #tpu.pipeline_mode<synchronous>, transform_indices = @transform_1, window_bounds = array<i64: 8, 128>}, {transform_indices = @transform_2, window_bounds = array<i64: 8, 128>}]} {
    %c8_i32 = arith.constant 8 : i32
    %0 = arith.muli %arg0, %c8_i32 : i32
    %c0_i32 = arith.constant 0 : i32
    %1 = arith.addi %0, %c0_i32 : i32
    %2 = arith.index_cast %1 : i32 to index
    %3 = memref.load %arg1[%2] : memref<16xi32, #tpu.memory_space<smem>>
    %4 = arith.index_cast %3 : i32 to index
    %c0 = arith.constant 0 : index
    %5 = vector.load %arg2[%4, %c0] : memref<1000x128xf32, #tpu.memory_space<vmem>>, vector<1x128xf32>
    %c0_0 = arith.constant 0 : index
    %c0_1 = arith.constant 0 : index
    %6 = vector.load %arg5[%c0_0, %c0_1] : memref<8x128xf32, #tpu.memory_space<vmem>>, vector<1x128xf32>
    tpu.vector_store %arg5[%c0_0, %c0_1], %5 {strides = array<i32>} : memref<8x128xf32, #tpu.memory_space<vmem>>, vector<1x128xf32>,
    %c1_i32 = arith.constant 1 : i32
    %7 = arith.addi %0, %c1_i32 : i32
    %8 = arith.index_cast %7 : i32 to index
    %9 = memref.load %arg1[%8] : memref<16xi32, #tpu.memory_space<smem>>
    %10 = arith.index_cast %9 : i32 to index
    %c0_2 = arith.constant 0 : index
    %11 = vector.load %arg2[%10, %c0_2] : memref<1000x128xf32, #tpu.memory_space<vmem>>, vector<1x128xf32>
    %c1 = arith.constant 1 : index
    %c0_3 = arith.constant 0 : index
    %12 = vector.load %arg5[%c1, %c0_3] : memref<8x128xf32, #tpu.memory_space<vmem>>, vector<1x128xf32>
    tpu.vector_store %arg5[%c1, %c0_3], %11 {strides = array<i32>} : memref<8x128xf32, #tpu.memory_space<vmem>>, vector<1x128xf32>,
    %c2_i32 = arith.constant 2 : i32
    %13 = arith.addi %0, %c2_i32 : i32
    %14 = arith.index_cast %13 : i32 to index
    %15 = memref.load %arg1[%14] : memref<16xi32, #tpu.memory_space<smem>>
    %16 = arith.index_cast %15 : i32 to index
    %c0_4 = arith.constant 0 : index
    %17 = vector.load %arg2[%16, %c0_4] : memref<1000x128xf32, #tpu.memory_space<vmem>>, vector<1x128xf32>
    %c2 = arith.constant 2 : index
    %c0_5 = arith.constant 0 : index
    %18 = vector.load %arg5[%c2, %c0_5] : memref<8x128xf32, #tpu.memory_space<vmem>>, vector<1x128xf32>
    tpu.vector_store %arg5[%c2, %c0_5], %17 {strides = array<i32>} : memref<8x128xf32, #tpu.memory_space<vmem>>, vector<1x128xf32>,
    %c3_i32 = arith.constant 3 : i32
    %19 = arith.addi %0, %c3_i32 : i32
    %20 = arith.index_cast %19 : i32 to index
    %21 = memref.load %arg1[%20] : memref<16xi32, #tpu.memory_space<smem>>
    %22 = arith.index_cast %21 : i32 to index
    %c0_6 = arith.constant 0 : index
    %23 = vector.load %arg2[%22, %c0_6] : memref<1000x128xf32, #tpu.memory_space<vmem>>, vector<1x128xf32>
    %c3 = arith.constant 3 : index
    %c0_7 = arith.constant 0 : index
    %24 = vector.load %arg5[%c3, %c0_7] : memref<8x128xf32, #tpu.memory_space<vmem>>, vector<1x128xf32>
    tpu.vector_store %arg5[%c3, %c0_7], %23 {strides = array<i32>} : memref<8x128xf32, #tpu.memory_space<vmem>>, vector<1x128xf32>,
    %c4_i32 = arith.constant 4 : i32
    %25 = arith.addi %0, %c4_i32 : i32
    %26 = arith.index_cast %25 : i32 to index
    %27 = memref.load %arg1[%26] : memref<16xi32, #tpu.memory_space<smem>>
    %28 = arith.index_cast %27 : i32 to index
    %c0_8 = arith.constant 0 : index
    %29 = vector.load %arg2[%28, %c0_8] : memref<1000x128xf32, #tpu.memory_space<vmem>>, vector<1x128xf32>
    %c4 = arith.constant 4 : index
    %c0_9 = arith.constant 0 : index
    %30 = vector.load %arg5[%c4, %c0_9] : memref<8x128xf32, #tpu.memory_space<vmem>>, vector<1x128xf32>
    tpu.vector_store %arg5[%c4, %c0_9], %29 {strides = array<i32>} : memref<8x128xf32, #tpu.memory_space<vmem>>, vector<1x128xf32>,
    %c5_i32 = arith.constant 5 : i32
    %31 = arith.addi %0, %c5_i32 : i32
    %32 = arith.index_cast %31 : i32 to index
    %33 = memref.load %arg1[%32] : memref<16xi32, #tpu.memory_space<smem>>
    %34 = arith.index_cast %33 : i32 to index
    %c0_10 = arith.constant 0 : index
    %35 = vector.load %arg2[%34, %c0_10] : memref<1000x128xf32, #tpu.memory_space<vmem>>, vector<1x128xf32>
    %c5 = arith.constant 5 : index
    %c0_11 = arith.constant 0 : index
    %36 = vector.load %arg5[%c5, %c0_11] : memref<8x128xf32, #tpu.memory_space<vmem>>, vector<1x128xf32>
    tpu.vector_store %arg5[%c5, %c0_11], %35 {strides = array<i32>} : memref<8x128xf32, #tpu.memory_space<vmem>>, vector<1x128xf32>,
    %c6_i32 = arith.constant 6 : i32
    %37 = arith.addi %0, %c6_i32 : i32
    %38 = arith.index_cast %37 : i32 to index
    %39 = memref.load %arg1[%38] : memref<16xi32, #tpu.memory_space<smem>>
    %40 = arith.index_cast %39 : i32 to index
    %c0_12 = arith.constant 0 : index
    %41 = vector.load %arg2[%40, %c0_12] : memref<1000x128xf32, #tpu.memory_space<vmem>>, vector<1x128xf32>
    %c6 = arith.constant 6 : index
    %c0_13 = arith.constant 0 : index
    %42 = vector.load %arg5[%c6, %c0_13] : memref<8x128xf32, #tpu.memory_space<vmem>>, vector<1x128xf32>
    tpu.vector_store %arg5[%c6, %c0_13], %41 {strides = array<i32>} : memref<8x128xf32, #tpu.memory_space<vmem>>, vector<1x128xf32>,
    %c7_i32 = arith.constant 7 : i32
    %43 = arith.addi %0, %c7_i32 : i32
    %44 = arith.index_cast %43 : i32 to index
    %45 = memref.load %arg1[%44] : memref<16xi32, #tpu.memory_space<smem>>
    %46 = arith.index_cast %45 : i32 to index
    %c0_14 = arith.constant 0 : index
    %47 = vector.load %arg2[%46, %c0_14] : memref<1000x128xf32, #tpu.memory_space<vmem>>, vector<1x128xf32>
    %c7 = arith.constant 7 : index
    %c0_15 = arith.constant 0 : index
    %48 = vector.load %arg5[%c7, %c0_15] : memref<8x128xf32, #tpu.memory_space<vmem>>, vector<1x128xf32>
    tpu.vector_store %arg5[%c7, %c0_15], %47 {strides = array<i32>} : memref<8x128xf32, #tpu.memory_space<vmem>>, vector<1x128xf32>,
    %c0_16 = arith.constant 0 : index
    %c0_17 = arith.constant 0 : index
    %49 = vector.load %arg3[%c0_16, %c0_17] : memref<8x128xf32, #tpu.memory_space<vmem>>, vector<8x128xf32>
    %c0_18 = arith.constant 0 : index
    %c0_19 = arith.constant 0 : index
    %50 = vector.load %arg5[%c0_18, %c0_19] : memref<8x128xf32, #tpu.memory_space<vmem>>, vector<8x128xf32>
    %cst = arith.constant 11.3137083 : f32
    %51 = vector.broadcast %cst : f32 to vector<8x128xf32>
    %52 = arith.mulf %50, %51 : vector<8x128xf32>
    %53 = arith.addf %52, %49 : vector<8x128xf32>
    %c0_20 = arith.constant 0 : index
    %c0_21 = arith.constant 0 : index
    %54 = vector.load %arg4[%c0_20, %c0_21] : memref<8x128xf32, #tpu.memory_space<vmem>>, vector<8x128xf32>
    tpu.vector_store %arg4[%c0_20, %c0_21], %53 {strides = array<i32>} : memref<8x128xf32, #tpu.memory_space<vmem>>, vector<8x128xf32>,
    return
  }
  func.func @transform_0(%arg0: i32, %arg1: memref<16xi32, #tpu.memory_space<smem>>) -> (i32, i32) {
    %c0_i32 = arith.constant 0 : i32
    %c0_i32_0 = arith.constant 0 : i32
    %c0_i32_1 = arith.constant 0 : i32
    return %c0_i32, %c0_i32_0 : i32, i32
  }
  func.func @transform_1(%arg0: i32, %arg1: memref<16xi32, #tpu.memory_space<smem>>) -> (i32, i32) {
    %c0_i32 = arith.constant 0 : i32
    %c0_i32_0 = arith.constant 0 : i32
    %c0_i32_1 = arith.constant 0 : i32
    return %c0_i32, %c0_i32_0 : i32, i32
  }
  func.func @transform_2(%arg0: i32, %arg1: memref<16xi32, #tpu.memory_space<smem>>) -> (i32, i32) {
    %c0_i32 = arith.constant 0 : i32
    %c0_i32_0 = arith.constant 0 : i32
    return %arg0, %c0_i32 : i32, i32
  }
}

</mosaic_0001>

<llo_original>
// kernel: embeddings_forward.1
$region0: #{embeddings_forward.1}
  #allocation0 [shape = 'u32[]', space=smem, size = 0x4, offset = 0x4, fixed_abs, tag = 'smem constant byte address 0x4 - core index']
  #allocation1 [shape = 'u32[144,128]{1,0:T(1,128)}', space=vmem, size = 0x12000, scoped, tag = 'internal scratch']
  #allocation2 [shape = 'f32[8,128]{1,0:T(8,128)}', space=vmem, size = 0x1000, scoped, tag = 'scratch operand']
  #allocation3 [shape = 's32[1]{0}', space=sflag, size = 0x4, scoped, tag = 'scoped memory for embeddings_forward.1']
  #allocation4 [shape = 'u8[512]{0}', space=smem, size = 0x200, scoped, tag = 'prefetched SMEM operand 0']
  %s0 = inlined_call_operand.vmem [shape: s32[16], index: 0, kind: input, shape index: {}]
  %s1 = inlined_call_operand.hbm [shape: f32[1000,128], index: 1, kind: input, shape index: {}]
  %s2 = inlined_call_operand.vmem [shape: f32[8,128], index: 2, kind: input, shape index: {}]
  %s3 = inlined_call_operand.hbm [shape: f32[16,128], index: 3, kind: output, shape index: {}]
  %s4 = sld [smem:[#allocation0]]
  $region45: #{embeddings_forward.1} parent=0
    _
  %s6 = ssub.s32 1, %s4
  %s7 = scalar_select 0, %s6, %s4
  %s8 = sshll.u32 %s0, 4
  %s9 = int_to_ptr.vmem [resolvable:$true] %s8
  %11 = dma.vmem_to_smem %s9, 16, [#allocation4], [#allocation3]
  %12 = dma.done [#allocation3], 16
  %13 = sfence
  $region1: #{embeddings_forward.1} parent=0
    #allocation5 [shape = 'u8[512000]{0}', space=vmem, size = 0x7d000, scoped, tag = 'input window, operand 1, single buffered']
    #allocation6 [shape = 's32[2]{0}', space=sflag, size = 0x8, scoped, tag = 'scoped memory for embeddings_forward.1']
    #allocation7 [shape = 's32[2]{0}', space=sflag, size = 0x8, scoped, tag = 'scoped memory for embeddings_forward.1']
    #allocation8 [shape = 'u8[8192]{0}', space=vmem, size = 0x2000, scoped, tag = 'output window, operand 0']
    %14 = vsyncpa [#allocation6], 0
    %15 = vsyncpa [#allocation7], 0
    %s16 = scalar_lea.sflag [#allocation7], 1
    %17 = vsyncpa %s16, 0
    loop: start=0, step=1, limit=4
    $region2: #{embeddings_forward.1} parent=1 // loop_pre_header
      _
    $region3: #{embeddings_forward.1} parent=1 // loop_header
      %s19 = sphi 0, %s23
      %p20 = scmp.ge.s32.totalorder %s19, 4
      %s27 = sphi 0, %s27
      %s29 = sphi 0, %s27
      %s30 = sphi 0, %s29
      %s44 = sphi 0, %s30
      %s48 = sphi 0, %s48
      %s50 = sphi 0, %s48
      %s51 = sphi 0, %s50
      %s65 = sphi 0, %s51
      %s71 = sphi 0, %s73
      %s74 = sphi 0, %s71
      %s75 = sphi 0, %s74
      %s91 = sphi 0, %s75
    $region4: #{embeddings_forward.1} parent=1 // loop_header_branch
      %22 = sbr.rel (%p20) target = $region8
    $region5: #{embeddings_forward.1} parent=1 // loop_body
      %s24 = ssub.s32 %s19, 1
      %s25 = ssub.s32 %s19, 2
      %s26 = sadd.s32 %s19, 1
      %s28 = sadd.s32 %s27, 1
      %p31 = scmp.eq.s32.totalorder %s19, 1
      %p32 = scmp.ne.s32.totalorder %s27, %s29
      %p33 = scmp.eq.s32.totalorder %s19, 0
      %p34 = por %p32, %p33
      %p35 = scmp.ne.s32.totalorder %s27, %s29
      %p36 = scmp.eq.s32.totalorder %s24, 1
      %p37 = por %p35, %p36
      %p38 = scmp.ne.s32.totalorder %s29, %s30
      %p39 = scmp.eq.s32.totalorder %s24, 0
      %p40 = por %p38, %p39
      %p41 = scmp.ne.s32.totalorder %s29, %s30
      %p42 = scmp.eq.s32.totalorder %s25, 1
      %p43 = por %p41, %p42
      %p45 = scmp.ne.s32.totalorder %s30, %s44
      %p46 = scmp.eq.s32.totalorder %s25, 0
      %p47 = por %p45, %p46
      %s49 = sadd.s32 %s48, 1
      %p52 = scmp.eq.s32.totalorder %s19, 1
      %p53 = scmp.ne.s32.totalorder %s48, %s50
      %p54 = scmp.eq.s32.totalorder %s19, 0
      %p55 = por %p53, %p54
      %p56 = scmp.ne.s32.totalorder %s48, %s50
      %p57 = scmp.eq.s32.totalorder %s24, 1
      %p58 = por %p56, %p57
      %p59 = scmp.ne.s32.totalorder %s50, %s51
      %p60 = scmp.eq.s32.totalorder %s24, 0
      %p61 = por %p59, %p60
      %p62 = scmp.ne.s32.totalorder %s50, %s51
      %p63 = scmp.eq.s32.totalorder %s25, 1
      %p64 = por %p62, %p63
      %p66 = scmp.ne.s32.totalorder %s51, %s65
      %p67 = scmp.eq.s32.totalorder %s25, 0
      %p68 = por %p66, %p67
      %s69 = ssub.s32 %s19, %s26
      %p70 = scmp.eq.s32.totalorder %s69, 0
      %s72 = sadd.s32 %s71, 1
      %s73 = scalar_select %p70, %s71, %s72
      %p76 = pneg %p70
      %p77 = scmp.eq.s32.totalorder %s19, 1
      %p78 = por %p76, %p77
      %p79 = scmp.ne.s32.totalorder %s71, %s74
      %p80 = scmp.eq.s32.totalorder %s19, 0
      %p81 = por %p79, %p80
      %p82 = scmp.ne.s32.totalorder %s71, %s74
      %p83 = scmp.eq.s32.totalorder %s24, 1
      %p84 = por %p82, %p83
      %p85 = scmp.ne.s32.totalorder %s74, %s75
      %p86 = scmp.eq.s32.totalorder %s24, 0
      %p87 = por %p85, %p86
      %p88 = scmp.ne.s32.totalorder %s74, %s75
      %p89 = scmp.eq.s32.totalorder %s25, 1
      %p90 = por %p88, %p89
      %p92 = scmp.ne.s32.totalorder %s75, %s91
      %p93 = scmp.eq.s32.totalorder %s25, 0
      %p94 = por %p92, %p93
      %p95 = scmp.le.s32.totalorder 1, %s19
      %p96 = scmp.lt.s32.totalorder %s19, 3
      %p97 = pnand %p95, %p96
      %p98 = pneg %p97
      // Predicated region
      $region9: #{embeddings_forward.1} parent=5 // pred_check
        _
      $region10: #{embeddings_forward.1} parent=5 // pred_check_branch
        %100 = sbr.rel (%p97) target = $region12
      $region11: #{embeddings_forward.1} parent=5 // pred_region
        %s101 = ssub.s32 %s19, 1
        // Predicated region
        $region13: #{embeddings_forward.1} parent=11 // pred_check
          %p102 = pneg %p40
        $region14: #{embeddings_forward.1} parent=11 // pred_check_branch
          %104 = sbr.rel (%p102) target = $region16
        $region15: #{embeddings_forward.1} parent=11 // pred_region
          %s106 = ssub.s32 16000, 16000
          %107 = vsyncadd [#allocation6], %s106
          %s108 = sshll.u32 [#allocation5], 4
          %s109 = int_to_ptr.vmem [resolvable:$true] %s108
          %114 = dma.hbm_to_vmem [thread:$0]  %s1, 16000, %s109, [#allocation6], 128, 128, 8
        $region16: #{embeddings_forward.1} parent=11 // pred_fallthru
          _
        // Predicated region
        $region17: #{embeddings_forward.1} parent=11 // pred_check
          %p115 = pneg %p61
        $region18: #{embeddings_forward.1} parent=11 // pred_check_branch
          %117 = sbr.rel (%p115) target = $region20
        $region19: #{embeddings_forward.1} parent=11 // pred_region
          _
        $region20: #{embeddings_forward.1} parent=11 // pred_fallthru
          _
      $region12: #{embeddings_forward.1} parent=5 // pred_fallthru
        _
      %p118 = scmp.lt.s32.totalorder %s19, 2
      // Predicated region
      $region21: #{embeddings_forward.1} parent=5 // pred_check
        %p119 = pneg %p118
      $region22: #{embeddings_forward.1} parent=5 // pred_check_branch
        %121 = sbr.rel (%p119) target = $region24
      $region23: #{embeddings_forward.1} parent=5 // pred_region
        _
      $region24: #{embeddings_forward.1} parent=5 // pred_fallthru
        _
      %p122 = scmp.le.s32.totalorder 1, %s19
      %p123 = scmp.lt.s32.totalorder %s19, 3
      %p124 = pnand %p122, %p123
      %p125 = pneg %p124
      // Predicated region
      $region25: #{embeddings_forward.1} parent=5 // pred_check
        _
      $region26: #{embeddings_forward.1} parent=5 // pred_check_branch
        %127 = sbr.rel (%p124) target = $region28
      $region27: #{embeddings_forward.1} parent=5 // pred_region
        %s128 = ssub.s32 %s19, 1
        // Predicated region
        $region29: #{embeddings_forward.1} parent=27 // pred_check
          %p129 = pneg %p40
        $region30: #{embeddings_forward.1} parent=27 // pred_check_branch
          %131 = sbr.rel (%p129) target = $region32
        $region31: #{embeddings_forward.1} parent=27 // pred_region
          %132 = dma.done [#allocation6], 16000
        $region32: #{embeddings_forward.1} parent=27 // pred_fallthru
          _
        %p133 = pneg %p40
        %p134 = pneg %p37
        %p135 = pneg %p61
        %p136 = pneg %p58
        %p137 = pneg %p87
        %p138 = pneg %p84
        %s139 = sand.u32 %s74, 1
        %s140 = scalar_lea.sflag [#allocation7], %s139
        %s141 = sand.u32 %s74, 1
        %s142 = smul.addr %s141, 8
        %s143 = scalar_lea.vmem [#allocation8], %s142
        %s144 = smul.u32 %s24, 8
        %s145 = sld [smem:[#allocation4 + %s144]]
        %s146 = scalar_lea.vmem [#allocation5], %s145
        %v147 = vld [vmem:[%s146] sm:$0x1]
        %148 = vst [vmem:[#allocation2] sm:$0x1] %v147
        %s149 = sadd.s32 %s144, 1
        %s150 = sld [smem:[#allocation4 + %s149]]
        %s151 = scalar_lea.vmem [#allocation5], %s150
        %v152 = vld [vmem:[%s151] sm:$0x1]
        %153 = vst [vmem:[#allocation2 + $0x1] sm:$0x1] %v152
        %s154 = sadd.s32 %s144, 2
        %s155 = sld [smem:[#allocation4 + %s154]]
        %s156 = scalar_lea.vmem [#allocation5], %s155
        %v157 = vld [vmem:[%s156] sm:$0x1]
        %158 = vst [vmem:[#allocation2 + $0x2] sm:$0x1] %v157
        %s159 = sadd.s32 %s144, 3
        %s160 = sld [smem:[#allocation4 + %s159]]
        %s161 = scalar_lea.vmem [#allocation5], %s160
        %v162 = vld [vmem:[%s161] sm:$0x1]
        %163 = vst [vmem:[#allocation2 + $0x3] sm:$0x1] %v162
        %s164 = sadd.s32 %s144, 4
        %s165 = sld [smem:[#allocation4 + %s164]]
        %s166 = scalar_lea.vmem [#allocation5], %s165
        %v167 = vld [vmem:[%s166] sm:$0x1]
        %168 = vst [vmem:[#allocation2 + $0x4] sm:$0x1] %v167
        %s169 = sadd.s32 %s144, 5
        %s170 = sld [smem:[#allocation4 + %s169]]
        %s171 = scalar_lea.vmem [#allocation5], %s170
        %v172 = vld [vmem:[%s171] sm:$0x1]
        %173 = vst [vmem:[#allocation2 + $0x5] sm:$0x1] %v172
        %s174 = sadd.s32 %s144, 6
        %s175 = sld [smem:[#allocation4 + %s174]]
        %s176 = scalar_lea.vmem [#allocation5], %s175
        %v177 = vld [vmem:[%s176] sm:$0x1]
        %178 = vst [vmem:[#allocation2 + $0x6] sm:$0x1] %v177
        %s179 = sadd.s32 %s144, 7
        %s180 = sld [smem:[#allocation4 + %s179]]
        %s181 = scalar_lea.vmem [#allocation5], %s180
        %v182 = vld [vmem:[%s181] sm:$0x1]
        %183 = vst [vmem:[#allocation2 + $0x7] sm:$0x1] %v182
        %v184 = vld [vmem:[%s2] sm:$0xff]
        %v185 = vld [vmem:[#allocation2] sm:$0xff]
        %v186 = vmul.f32 %v185, 11.313708
        %v187 = vadd.f32 %v186, %v184
        %188 = vst [vmem:[%s143] sm:$0xff] %v187
        %s189 = sand.u32 %s74, 1
        %s190 = scalar_lea.sflag [#allocation7], %s189
        %s191 = sand.u32 %s74, 1
        %s192 = smul.addr %s191, 8
        %s193 = scalar_lea.vmem [#allocation8], %s192
        // Predicated region
        $region33: #{embeddings_forward.1} parent=27 // pred_check
          %p194 = pneg %p84
        $region34: #{embeddings_forward.1} parent=27 // pred_check_branch
          %196 = sbr.rel (%p194) target = $region36
        $region35: #{embeddings_forward.1} parent=27 // pred_region
          %s198 = ssub.s32 128, 128
          %199 = vsyncadd %s190, %s198
          %s200 = smul.addr %s24, 128
          %s201 = scalar_lea.hbm %s3, %s200
          %s203 = sshll.u32 %s193, 4
          %s204 = int_to_ptr.vmem [resolvable:$true] %s203
          %206 = dma.vmem_to_hbm [thread:$0]  %s204, 128, %s201, %s190
        $region36: #{embeddings_forward.1} parent=27 // pred_fallthru
          _
      $region28: #{embeddings_forward.1} parent=5 // pred_fallthru
        _
      %p207 = scmp.le.s32.totalorder 2, %s19
      // Predicated region
      $region37: #{embeddings_forward.1} parent=5 // pred_check
        %p208 = pneg %p207
      $region38: #{embeddings_forward.1} parent=5 // pred_check_branch
        %210 = sbr.rel (%p208) target = $region40
      $region39: #{embeddings_forward.1} parent=5 // pred_region
        %s211 = ssub.s32 %s19, 2
        // Predicated region
        $region41: #{embeddings_forward.1} parent=39 // pred_check
          %p212 = pneg %p90
        $region42: #{embeddings_forward.1} parent=39 // pred_check_branch
          %214 = sbr.rel (%p212) target = $region44
        $region43: #{embeddings_forward.1} parent=39 // pred_region
          %s215 = sand.u32 %s75, 1
          %s216 = scalar_lea.sflag [#allocation7], %s215
          %s217 = sand.u32 %s75, 1
          %s218 = smul.addr %s217, 8
          %s219 = scalar_lea.vmem [#allocation8], %s218
          %220 = dma.done %s216, 128
        $region44: #{embeddings_forward.1} parent=39 // pred_fallthru
          _
      $region40: #{embeddings_forward.1} parent=5 // pred_fallthru
        _
    $region6: #{embeddings_forward.1} parent=1 // loop_footer
      %s23 = sadd.s32 1, %s19
    $region7: #{embeddings_forward.1} parent=1 // loop_footer_branch
      %18 = sbr.rel target = $region3
    $region8: #{embeddings_forward.1} parent=1 // loop_exit
      _
    %221 = vsyncpa [#allocation6], 1
    %s222 = scalar_lea.sflag [#allocation6], 1
    %223 = vsyncpa %s222, 1
    %224 = vsyncpa [#allocation7], 1
    %s225 = scalar_lea.sflag [#allocation7], 1
    %226 = vsyncpa %s225, 1

</llo_original>
